<compile_context>
chip_gen: v6e
topology: v6e:2x2x1
jax: 0.10.0
libtpu: 0.0.40
codegen_flags: <defaults>
</compile_context>

<pallas_src>
import functools

import jax
import jax.numpy as jnp
from jax.experimental import pallas as pl
from jax.experimental.pallas import tpu as pltpu

# Layer dimensions from the module definition.
DIMS = [92, 70, 40, 16, 40, 70, 92]
N_LAYERS = 6
F_PAD = 128             # lane-padded feature width for layers 1..6
DEFAULT_TILE_B = 2048   # max batch rows per grid step (sweepable 2048-4096)
DEFAULT_CHUNK = 256     # rows per in-kernel sub-chunk (sweep {128,256,512})


def _round_up(n, m):
    return ((n + m - 1) // m) * m


def _pick_tanh_dtype():
    """bf16 tanh on chips with a native bf16 EUP (v6e/v7x), f32 elsewhere."""
    try:
        kind = jax.devices()[0].device_kind.lower()
    except Exception:
        kind = ""
    if "v6" in kind or "v7" in kind:
        return jnp.bfloat16
    return jnp.float32


def _choose_tiling(batch, max_tile_b, chunk):
    """Pick (tile_b, chunk, b_pad) so b_pad ~= batch and big batches get >=2 steps."""
    n_steps = max(1, pl.cdiv(batch, max_tile_b))
    if n_steps == 1 and batch >= 2 * chunk:
        n_steps = 2                       # >=2 grid steps -> v7x megacore shards
    tile_b = pl.cdiv(batch, n_steps)
    if tile_b >= chunk:
        tile_b = _round_up(tile_b, chunk)
    else:
        tile_b = max(8, _round_up(tile_b, 8))
        chunk = tile_b                    # single sub-chunk for tiny batches
    b_pad = _round_up(batch, tile_b)
    return int(tile_b), int(chunk), int(b_pad)


def _make_kernel(n_chunks, chunk, tanh_dtype):
    """Fused 6-layer MLP on one batch tile, processed in `chunk`-row pieces.

    x_ref  : (TILE_B, 92)       f32   raw activation tile (unpadded features)
    w0_ref : (92, 128)          bf16  layer-0 weight, out-dim zero-padded
    w_ref  : (5, 128, 128)      bf16  layers 1..5 weights, zero-padded
    b_ref  : (6, 1, 128)        f32   biases, zero-padded
    out_ref: (TILE_B, 128)      bf16  lane-dense output tile
    """
    def kernel(x_ref, w0_ref, w_ref, b_ref, out_ref):
        @pl.loop(0, n_chunks)
        def _chunk(c):
            r = pl.multiple_of(c * chunk, chunk)
            # Cast to bf16 in-kernel; the MXU contracts over the true 92 cols.
            h = x_ref[pl.ds(r, chunk), :].astype(jnp.bfloat16)
            for i in range(N_LAYERS):
                w = w0_ref[...] if i == 0 else w_ref[i - 1]
                z = jnp.dot(h, w, preferred_element_type=jnp.float32) + b_ref[i]
                if i < N_LAYERS - 1:
                    # tanh on the EUP; bf16 on v6e/v7x, f32 on v5e.
                    h = jnp.tanh(z.astype(tanh_dtype)).astype(jnp.bfloat16)
                else:
                    out_ref[pl.ds(r, chunk), :] = z.astype(out_ref.dtype)

    return kernel


def make_params(key):
    """Mirror the PyTorch init: xavier_normal_ weights, bias = 0.01.
    Weights are stored pre-transposed as [in_features, out_features]."""
    params = []
    for i in range(N_LAYERS):
        fan_in, fan_out = DIMS[i], DIMS[i + 1]
        key, sub = jax.random.split(key)
        std = jnp.sqrt(2.0 / (fan_in + fan_out))     # xavier normal, gain=1
        w = jax.random.normal(sub, (fan_in, fan_out), dtype=jnp.float32) * std
        b = jnp.full((fan_out,), 0.01, dtype=jnp.float32)
        params.append((w, b))
    return params


def pack_params(params):
    """Zero-pad layer outputs to 128 lanes; layer-0 keeps its true 92-row in-dim."""
    w0 = jnp.zeros((DIMS[0], F_PAD), jnp.float32)
    w0 = w0.at[:, :DIMS[1]].set(params[0][0])
    w_stack = jnp.zeros((N_LAYERS - 1, F_PAD, F_PAD), jnp.float32)
    b_stack = jnp.zeros((N_LAYERS, 1, F_PAD), jnp.float32)
    b_stack = b_stack.at[0, 0, :DIMS[1]].set(params[0][1])
    for i in range(1, N_LAYERS):
        w, b = params[i]
        w_stack = w_stack.at[i - 1, :w.shape[0], :w.shape[1]].set(w)
        b_stack = b_stack.at[i, 0, :b.shape[0]].set(b)
    # weights bf16 into the MXU, biases stay f32 (added to the f32 accumulator)
    return w0.astype(jnp.bfloat16), w_stack.astype(jnp.bfloat16), b_stack


def autoencoder_forward(x, packed, max_tile_b=DEFAULT_TILE_B,
                        chunk=DEFAULT_CHUNK, tanh_dtype=None):
    """x: [batch, 92] float32 -> [batch, 92] bfloat16."""
    w0, w_stack, b_stack = packed
    batch = x.shape[0]
    if tanh_dtype is None:
        tanh_dtype = _pick_tanh_dtype()

    tile_b, chunk, b_pad = _choose_tiling(batch, max_tile_b, chunk)
    n_chunks = tile_b // chunk

    if b_pad != batch:
        x = jnp.pad(x, ((0, b_pad - batch), (0, 0)))

    kernel = _make_kernel(n_chunks, chunk, tanh_dtype)

    out = pl.pallas_call(
        kernel,
        out_shape=jax.ShapeDtypeStruct((b_pad, F_PAD), jnp.bfloat16),
        grid=(b_pad // tile_b,),
        in_specs=[
            # activation tile: pipelined / double-buffered per grid step
            pl.BlockSpec((tile_b, DIMS[0]), lambda i: (i, 0)),
            # weights & biases: same block every step -> stay VMEM-resident
            pl.BlockSpec((DIMS[0], F_PAD), lambda i: (0, 0)),
            pl.BlockSpec((N_LAYERS - 1, F_PAD, F_PAD), lambda i: (0, 0, 0)),
            pl.BlockSpec((N_LAYERS, 1, F_PAD), lambda i: (0, 0, 0)),
        ],
        out_specs=pl.BlockSpec((tile_b, F_PAD), lambda i: (i, 0)),
        compiler_params=pltpu.CompilerParams(
            dimension_semantics=("parallel",)),      # megacore on v7x
    )(x, w0, w_stack, b_stack)

    # TODO(synk): downstream consumers could take the padded (b_pad, 128) bf16
    # slab directly and skip this extra slice pass over HBM.
    return out[:batch, :DIMS[-1]]


def reference_forward(x, params):
    """Pure-JAX f32 reference matching the PyTorch forward."""
    h = x
    h = jnp.tanh(h @ params[0][0] + params[0][1])    # encode
    h = jnp.tanh(h @ params[1][0] + params[1][1])
    h = h @ params[2][0] + params[2][1]
    h = jnp.tanh(h)                                  # decode
    h = jnp.tanh(h @ params[3][0] + params[3][1])
    h = jnp.tanh(h @ params[4][0] + params[4][1])
    h = h @ params[5][0] + params[5][1]
    return h


if __name__ == "__main__":
    key = jax.random.PRNGKey(0)
    pkey, xkey, xkey2 = jax.random.split(key, 3)

    params = make_params(pkey)
    packed = pack_params(params)

    # 1) Small single-tile check.
    batch_small = 8
    x_small = jax.random.normal(xkey, (batch_small, DIMS[0]), dtype=jnp.float32)
    out_small = jax.block_until_ready(autoencoder_forward(x_small, packed))
    ref_small = reference_forward(x_small, params)
    assert out_small.shape == (batch_small, DIMS[-1]), out_small.shape
    diff_s = float(jnp.max(jnp.abs(out_small.astype(jnp.float32) - ref_small)))
    assert jnp.allclose(out_small.astype(jnp.float32), ref_small,
                        atol=5e-2, rtol=5e-2), (
        "small-batch mismatch vs reference, max abs diff = %.4g" % diff_s)

    # 2) Multi-step grid check (exercises pipelining + batch padding path).
    batch_big = 600
    x_big = jax.random.normal(xkey2, (batch_big, DIMS[0]), dtype=jnp.float32)
    out_big = jax.block_until_ready(
        autoencoder_forward(x_big, packed, max_tile_b=256))
    ref_big = reference_forward(x_big, params)
    assert out_big.shape == (batch_big, DIMS[-1]), out_big.shape
    diff_b = float(jnp.max(jnp.abs(out_big.astype(jnp.float32) - ref_big)))
    assert jnp.allclose(out_big.astype(jnp.float32), ref_big,
                        atol=5e-2, rtol=5e-2), (
        "multi-tile mismatch vs reference, max abs diff = %.4g" % diff_b)

    print("KERNEL_OK")
</pallas_src>

<mosaic_0001>
module attributes {stable_mosaic.version = 11 : i64} {
  func.func @kernel(%arg0: i32, %arg1: memref<8x92xf32, #tpu.memory_space<vmem>>, %arg2: memref<92x128xbf16, #tpu.memory_space<vmem>>, %arg3: memref<5x128x128xbf16, #tpu.memory_space<vmem>>, %arg4: memref<6x1x128xf32, #tpu.memory_space<vmem>>, %arg5: memref<8x128xbf16, #tpu.memory_space<vmem>>) attributes {dimension_semantics = [#tpu.dimension_semantics<parallel>], iteration_bounds = array<i64: 1>, scalar_prefetch = 0 : i64, scratch_operands = 0 : i64, tpu.core_type = #tpu.core_type<tc>, window_params = [{transform_indices = @transform_0, window_bounds = array<i64: 8, 92>}, {pipeline_mode = #tpu.pipeline_mode<synchronous>, transform_indices = @transform_1, window_bounds = array<i64: 92, 128>}, {pipeline_mode = #tpu.pipeline_mode<synchronous>, transform_indices = @transform_2, window_bounds = array<i64: 5, 128, 128>}, {pipeline_mode = #tpu.pipeline_mode<synchronous>, transform_indices = @transform_3, window_bounds = array<i64: 6, 1, 128>}, {transform_indices = @transform_4, window_bounds = array<i64: 8, 128>}]} {
    %c0_i32 = arith.constant 0 : i32
    %c1_i32 = arith.constant 1 : i32
    %0 = arith.muli %c0_i32, %c1_i32 : i32
    %c0_i32_0 = arith.constant 0 : i32
    %1 = arith.addi %c0_i32_0, %0 : i32
    %c8_i32 = arith.constant 8 : i32
    %2 = arith.muli %1, %c8_i32 : i32
    %3 = tpu.assume_multiple %2, 8 : i32
    %4 = arith.index_cast %3 : i32 to index
    %c0 = arith.constant 0 : index
    %5 = vector.load %arg1[%4, %c0] : memref<8x92xf32, #tpu.memory_space<vmem>>, vector<8x92xf32>
    %6 = arith.truncf %5 : vector<8x92xf32> to vector<8x92xbf16>
    %c0_1 = arith.constant 0 : index
    %c0_2 = arith.constant 0 : index
    %7 = vector.load %arg2[%c0_1, %c0_2] : memref<92x128xbf16, #tpu.memory_space<vmem>>, vector<92x128xbf16>
    %cst = arith.constant dense<0.000000e+00> : vector<8x128xf32>
    %8 = tpu.matmul %6, %7, %cst {dimension_numbers = #tpu.dot_dimension_numbers<[1], [0], [0], [1], [0, 0, 1, 1], [], []>} : vector<8x92xbf16>, vector<92x128xbf16>, vector<8x128xf32> -> vector<8x128xf32>
    %c0_3 = arith.constant 0 : index
    %c0_4 = arith.constant 0 : index
    %c0_5 = arith.constant 0 : index
    %9 = vector.load %arg4[%c0_3, %c0_4, %c0_5] : memref<6x1x128xf32, #tpu.memory_space<vmem>>, vector<1x1x128xf32>
    %10 = vector.shape_cast %9 : vector<1x1x128xf32> to vector<1x128xf32>
    %11 = vector.broadcast %10 : vector<1x128xf32> to vector<8x128xf32>
    %12 = arith.addf %8, %11 : vector<8x128xf32>
    %13 = math.tanh %12 : vector<8x128xf32>
    %14 = arith.truncf %13 : vector<8x128xf32> to vector<8x128xbf16>
    %c0_6 = arith.constant 0 : index
    %c0_7 = arith.constant 0 : index
    %c0_8 = arith.constant 0 : index
    %15 = vector.load %arg3[%c0_6, %c0_7, %c0_8] : memref<5x128x128xbf16, #tpu.memory_space<vmem>>, vector<1x128x128xbf16>
    %16 = vector.shape_cast %15 : vector<1x128x128xbf16> to vector<128x128xbf16>
    %cst_9 = arith.constant dense<0.000000e+00> : vector<8x128xf32>
    %17 = tpu.matmul %14, %16, %cst_9 {dimension_numbers = #tpu.dot_dimension_numbers<[1], [0], [0], [1], [0, 0, 1, 1], [], []>} : vector<8x128xbf16>, vector<128x128xbf16>, vector<8x128xf32> -> vector<8x128xf32>
    %c1 = arith.constant 1 : index
    %c0_10 = arith.constant 0 : index
    %c0_11 = arith.constant 0 : index
    %18 = vector.load %arg4[%c1, %c0_10, %c0_11] : memref<6x1x128xf32, #tpu.memory_space<vmem>>, vector<1x1x128xf32>
    %19 = vector.shape_cast %18 : vector<1x1x128xf32> to vector<1x128xf32>
    %20 = vector.broadcast %19 : vector<1x128xf32> to vector<8x128xf32>
    %21 = arith.addf %17, %20 : vector<8x128xf32>
    %22 = math.tanh %21 : vector<8x128xf32>
    %23 = arith.truncf %22 : vector<8x128xf32> to vector<8x128xbf16>
    %c1_12 = arith.constant 1 : index
    %c0_13 = arith.constant 0 : index
    %c0_14 = arith.constant 0 : index
    %24 = vector.load %arg3[%c1_12, %c0_13, %c0_14] : memref<5x128x128xbf16, #tpu.memory_space<vmem>>, vector<1x128x128xbf16>
    %25 = vector.shape_cast %24 : vector<1x128x128xbf16> to vector<128x128xbf16>
    %cst_15 = arith.constant dense<0.000000e+00> : vector<8x128xf32>
    %26 = tpu.matmul %23, %25, %cst_15 {dimension_numbers = #tpu.dot_dimension_numbers<[1], [0], [0], [1], [0, 0, 1, 1], [], []>} : vector<8x128xbf16>, vector<128x128xbf16>, vector<8x128xf32> -> vector<8x128xf32>
    %c2 = arith.constant 2 : index
    %c0_16 = arith.constant 0 : index
    %c0_17 = arith.constant 0 : index
    %27 = vector.load %arg4[%c2, %c0_16, %c0_17] : memref<6x1x128xf32, #tpu.memory_space<vmem>>, vector<1x1x128xf32>
    %28 = vector.shape_cast %27 : vector<1x1x128xf32> to vector<1x128xf32>
    %29 = vector.broadcast %28 : vector<1x128xf32> to vector<8x128xf32>
    %30 = arith.addf %26, %29 : vector<8x128xf32>
    %31 = math.tanh %30 : vector<8x128xf32>
    %32 = arith.truncf %31 : vector<8x128xf32> to vector<8x128xbf16>
    %c2_18 = arith.constant 2 : index
    %c0_19 = arith.constant 0 : index
    %c0_20 = arith.constant 0 : index
    %33 = vector.load %arg3[%c2_18, %c0_19, %c0_20] : memref<5x128x128xbf16, #tpu.memory_space<vmem>>, vector<1x128x128xbf16>
    %34 = vector.shape_cast %33 : vector<1x128x128xbf16> to vector<128x128xbf16>
    %cst_21 = arith.constant dense<0.000000e+00> : vector<8x128xf32>
    %35 = tpu.matmul %32, %34, %cst_21 {dimension_numbers = #tpu.dot_dimension_numbers<[1], [0], [0], [1], [0, 0, 1, 1], [], []>} : vector<8x128xbf16>, vector<128x128xbf16>, vector<8x128xf32> -> vector<8x128xf32>
    %c3 = arith.constant 3 : index
    %c0_22 = arith.constant 0 : index
    %c0_23 = arith.constant 0 : index
    %36 = vector.load %arg4[%c3, %c0_22, %c0_23] : memref<6x1x128xf32, #tpu.memory_space<vmem>>, vector<1x1x128xf32>
    %37 = vector.shape_cast %36 : vector<1x1x128xf32> to vector<1x128xf32>
    %38 = vector.broadcast %37 : vector<1x128xf32> to vector<8x128xf32>
    %39 = arith.addf %35, %38 : vector<8x128xf32>
    %40 = math.tanh %39 : vector<8x128xf32>
    %41 = arith.truncf %40 : vector<8x128xf32> to vector<8x128xbf16>
    %c3_24 = arith.constant 3 : index
    %c0_25 = arith.constant 0 : index
    %c0_26 = arith.constant 0 : index
    %42 = vector.load %arg3[%c3_24, %c0_25, %c0_26] : memref<5x128x128xbf16, #tpu.memory_space<vmem>>, vector<1x128x128xbf16>
    %43 = vector.shape_cast %42 : vector<1x128x128xbf16> to vector<128x128xbf16>
    %cst_27 = arith.constant dense<0.000000e+00> : vector<8x128xf32>
    %44 = tpu.matmul %41, %43, %cst_27 {dimension_numbers = #tpu.dot_dimension_numbers<[1], [0], [0], [1], [0, 0, 1, 1], [], []>} : vector<8x128xbf16>, vector<128x128xbf16>, vector<8x128xf32> -> vector<8x128xf32>
    %c4 = arith.constant 4 : index
    %c0_28 = arith.constant 0 : index
    %c0_29 = arith.constant 0 : index
    %45 = vector.load %arg4[%c4, %c0_28, %c0_29] : memref<6x1x128xf32, #tpu.memory_space<vmem>>, vector<1x1x128xf32>
    %46 = vector.shape_cast %45 : vector<1x1x128xf32> to vector<1x128xf32>
    %47 = vector.broadcast %46 : vector<1x128xf32> to vector<8x128xf32>
    %48 = arith.addf %44, %47 : vector<8x128xf32>
    %49 = math.tanh %48 : vector<8x128xf32>
    %50 = arith.truncf %49 : vector<8x128xf32> to vector<8x128xbf16>
    %c4_30 = arith.constant 4 : index
    %c0_31 = arith.constant 0 : index
    %c0_32 = arith.constant 0 : index
    %51 = vector.load %arg3[%c4_30, %c0_31, %c0_32] : memref<5x128x128xbf16, #tpu.memory_space<vmem>>, vector<1x128x128xbf16>
    %52 = vector.shape_cast %51 : vector<1x128x128xbf16> to vector<128x128xbf16>
    %cst_33 = arith.constant dense<0.000000e+00> : vector<8x128xf32>
    %53 = tpu.matmul %50, %52, %cst_33 {dimension_numbers = #tpu.dot_dimension_numbers<[1], [0], [0], [1], [0, 0, 1, 1], [], []>} : vector<8x128xbf16>, vector<128x128xbf16>, vector<8x128xf32> -> vector<8x128xf32>
    %c5 = arith.constant 5 : index
    %c0_34 = arith.constant 0 : index
    %c0_35 = arith.constant 0 : index
    %54 = vector.load %arg4[%c5, %c0_34, %c0_35] : memref<6x1x128xf32, #tpu.memory_space<vmem>>, vector<1x1x128xf32>
    %55 = vector.shape_cast %54 : vector<1x1x128xf32> to vector<1x128xf32>
    %56 = vector.broadcast %55 : vector<1x128xf32> to vector<8x128xf32>
    %57 = arith.addf %53, %56 : vector<8x128xf32>
    %58 = arith.truncf %57 : vector<8x128xf32> to vector<8x128xbf16>
    %59 = arith.index_cast %3 : i32 to index
    %c0_36 = arith.constant 0 : index
    %60 = vector.load %arg5[%59, %c0_36] : memref<8x128xbf16, #tpu.memory_space<vmem>>, vector<8x128xbf16>
    tpu.vector_store %arg5[%59, %c0_36], %58 {strides = array<i32>} : memref<8x128xbf16, #tpu.memory_space<vmem>>, vector<8x128xbf16>,
    %c1_i32_37 = arith.constant 1 : i32
    return
  }
  func.func @transform_0(%arg0: i32) -> (i32, i32) {
    %c0_i32 = arith.constant 0 : i32
    %c0_i32_0 = arith.constant 0 : i32
    return %arg0, %c0_i32 : i32, i32
  }
  func.func @transform_1(%arg0: i32) -> (i32, i32) {
    %c0_i32 = arith.constant 0 : i32
    %c0_i32_0 = arith.constant 0 : i32
    %c0_i32_1 = arith.constant 0 : i32
    return %c0_i32, %c0_i32_0 : i32, i32
  }
  func.func @transform_2(%arg0: i32) -> (i32, i32, i32) {
    %c0_i32 = arith.constant 0 : i32
    %c0_i32_0 = arith.constant 0 : i32
    %c0_i32_1 = arith.constant 0 : i32
    %c0_i32_2 = arith.constant 0 : i32
    return %c0_i32, %c0_i32_0, %c0_i32_1 : i32, i32, i32
  }
  func.func @transform_3(%arg0: i32) -> (i32, i32, i32) {
    %c0_i32 = arith.constant 0 : i32
    %c0_i32_0 = arith.constant 0 : i32
    %c0_i32_1 = arith.constant 0 : i32
    %c0_i32_2 = arith.constant 0 : i32
    return %c0_i32, %c0_i32_0, %c0_i32_1 : i32, i32, i32
  }
  func.func @transform_4(%arg0: i32) -> (i32, i32) {
    %c0_i32 = arith.constant 0 : i32
    %c0_i32_0 = arith.constant 0 : i32
    return %arg0, %c0_i32 : i32, i32
  }
}

</mosaic_0001>

<llo_original>
// kernel: tpu_custom_call.1
$region0: #{tpu_custom_call.1}
  #allocation0 [shape = 'u32[]', space=smem, size = 0x4, offset = 0x4, fixed_abs, tag = 'smem constant byte address 0x4 - core index']
  #allocation1 [shape = 'u32[144,128]{1,0:T(1,128)}', space=vmem, size = 0x12000, scoped, tag = 'internal scratch']
  %s0 = inlined_call_operand.hbm [shape: f32[8,92], index: 0, kind: input, shape index: {}]
  %s1 = inlined_call_operand.hbm [shape: bf16[92,128], index: 1, kind: input, shape index: {}]
  %s2 = inlined_call_operand.hbm [shape: bf16[5,128,128], index: 2, kind: input, shape index: {}]
  %s3 = inlined_call_operand.hbm [shape: f32[6,1,128], index: 3, kind: input, shape index: {}]
  %s4 = inlined_call_operand.hbm [shape: bf16[8,128], index: 4, kind: output, shape index: {}]
  %s5 = sld [smem:[#allocation0]]
  $region42: #{tpu_custom_call.1} parent=0
    _
  %s7 = ssub.s32 1, %s5
  %s8 = scalar_select 0, %s7, %s5
  $region1: #{tpu_custom_call.1} parent=0
    #allocation2 [shape = 'u8[4096]{0}', space=vmem, size = 0x1000, scoped, tag = 'input window, operand 0, single buffered']
    #allocation3 [shape = 's32[1]{0}', space=sflag, size = 0x4, scoped, tag = 'scoped memory for tpu_custom_call.1']
    #allocation4 [shape = 's32[1]{0}', space=sflag, size = 0x4, scoped, tag = 'scoped memory for tpu_custom_call.1']
    #allocation5 [shape = 'u8[24576]{0}', space=vmem, size = 0x6000, scoped, tag = 'input window, operand 1, single buffered']
    #allocation6 [shape = 's32[1]{0}', space=sflag, size = 0x4, scoped, tag = 'scoped memory for tpu_custom_call.1']
    #allocation7 [shape = 'u8[163840]{0}', space=vmem, size = 0x28000, scoped, tag = 'input window, operand 2, single buffered']
    #allocation8 [shape = 'u8[3072]{0}', space=vmem, size = 0xc00, scoped, tag = 'input window, operand 3, single buffered']
    #allocation9 [shape = 's32[1]{0}', space=sflag, size = 0x4, scoped, tag = 'scoped memory for tpu_custom_call.1']
    #allocation10 [shape = 'u8[2048]{0}', space=vmem, size = 0x800, scoped, tag = 'output window, operand 0, single buffered']
    %9 = vsyncpa [#allocation3], 0
    %10 = vsyncpa [#allocation6], 0
    %11 = vsyncpa [#allocation9], 0
    %12 = vsyncpa [#allocation4], 0
    // Predicated region
    $region2: #{tpu_custom_call.1} parent=1 // pred_check
      _
    $region3: #{tpu_custom_call.1} parent=1 // pred_check_branch
      %14 = sbr.rel (0) target = $region5
    $region4: #{tpu_custom_call.1} parent=1 // pred_region
      %s16 = ssub.s32 128, 128
      %17 = vsyncadd [#allocation3], %s16
      %s19 = sshll.u32 [#allocation2], 4
      %s20 = int_to_ptr.vmem [resolvable:$true] %s19
      %22 = dma.hbm_to_vmem [thread:$0]  %s0, 128, %s20, [#allocation3]
    $region5: #{tpu_custom_call.1} parent=1 // pred_fallthru
      _
    // Predicated region
    $region6: #{tpu_custom_call.1} parent=1 // pred_check
      _
    $region7: #{tpu_custom_call.1} parent=1 // pred_check_branch
      %24 = sbr.rel (0) target = $region9
    $region8: #{tpu_custom_call.1} parent=1 // pred_region
      %s26 = ssub.s32 768, 768
      %27 = vsyncadd [#allocation6], %s26
      %s28 = sshll.u32 [#allocation5], 4
      %s29 = int_to_ptr.vmem [resolvable:$true] %s28
      %34 = dma.hbm_to_vmem [thread:$0]  %s1, 768, %s29, [#allocation6], 64, 64, 4
    $region9: #{tpu_custom_call.1} parent=1 // pred_fallthru
      _
    // Predicated region
    $region10: #{tpu_custom_call.1} parent=1 // pred_check
      _
    $region11: #{tpu_custom_call.1} parent=1 // pred_check_branch
      %36 = sbr.rel (0) target = $region13
    $region12: #{tpu_custom_call.1} parent=1 // pred_region
      %s38 = ssub.s32 5120, 5120
      %39 = vsyncadd [#allocation6], %s38
      %s40 = sshll.u32 [#allocation7], 4
      %s41 = int_to_ptr.vmem [resolvable:$true] %s40
      %46 = dma.hbm_to_vmem [thread:$0]  %s2, 5120, %s41, [#allocation6], 64, 64, 4
    $region13: #{tpu_custom_call.1} parent=1 // pred_fallthru
      _
    // Predicated region
    $region14: #{tpu_custom_call.1} parent=1 // pred_check
      _
    $region15: #{tpu_custom_call.1} parent=1 // pred_check_branch
      %48 = sbr.rel (0) target = $region17
    $region16: #{tpu_custom_call.1} parent=1 // pred_region
      %s50 = ssub.s32 96, 96
      %51 = vsyncadd [#allocation9], %s50
      %s52 = sshll.u32 [#allocation8], 4
      %s53 = int_to_ptr.vmem [resolvable:$true] %s52
      %58 = dma.hbm_to_vmem [thread:$0]  %s3, 96, %s53, [#allocation9], 16, 16, 1
    $region17: #{tpu_custom_call.1} parent=1 // pred_fallthru
      _
    // Predicated region
    $region18: #{tpu_custom_call.1} parent=1 // pred_check
      _
    $region19: #{tpu_custom_call.1} parent=1 // pred_check_branch
      %60 = sbr.rel (0) target = $region21
    $region20: #{tpu_custom_call.1} parent=1 // pred_region
      %61 = dma.done [#allocation3], 128
    $region21: #{tpu_custom_call.1} parent=1 // pred_fallthru
      _
    // Predicated region
    $region22: #{tpu_custom_call.1} parent=1 // pred_check
      _
    $region23: #{tpu_custom_call.1} parent=1 // pred_check_branch
      %63 = sbr.rel (0) target = $region25
    $region24: #{tpu_custom_call.1} parent=1 // pred_region
      %64 = dma.done [#allocation6], 768
    $region25: #{tpu_custom_call.1} parent=1 // pred_fallthru
      _
    // Predicated region
    $region26: #{tpu_custom_call.1} parent=1 // pred_check
      _
    $region27: #{tpu_custom_call.1} parent=1 // pred_check_branch
      %66 = sbr.rel (0) target = $region29
    $region28: #{tpu_custom_call.1} parent=1 // pred_region
      %67 = dma.done [#allocation6], 5120
    $region29: #{tpu_custom_call.1} parent=1 // pred_fallthru
      _
    // Predicated region
    $region30: #{tpu_custom_call.1} parent=1 // pred_check
      _
    $region31: #{tpu_custom_call.1} parent=1 // pred_check_branch
      %69 = sbr.rel (0) target = $region33
    $region32: #{tpu_custom_call.1} parent=1 // pred_region
      %70 = dma.done [#allocation9], 96
    $region33: #{tpu_custom_call.1} parent=1 // pred_fallthru
      _
    %v72 = vld [vmem:[#allocation2] sm:$0xff]
    %v73 = vpack.c.bf16 %v72, %v72
    %v74 = vld [vmem:[#allocation5] sm:$0xf]
    %v75 = vld [vmem:[#allocation5 + $0x4] sm:$0xf]
    %v76 = vld [vmem:[#allocation5 + $0x8] sm:$0xf]
    %v77 = vld [vmem:[#allocation5 + $0xc] sm:$0xf]
    %v78 = vld [vmem:[#allocation5 + $0x10] sm:$0xf]
    %v79 = vld [vmem:[#allocation5 + $0x14] sm:$0xf]
    %v80 = vld [vmem:[#allocation5 + $0x18] sm:$0xf]
    %v81 = vld [vmem:[#allocation5 + $0x1c] sm:$0xf]
    %v82 = vld [vmem:[#allocation5 + $0x20] sm:$0xf]
    %v83 = vld [vmem:[#allocation5 + $0x24] sm:$0xf]
    %v84 = vld [vmem:[#allocation5 + $0x28] sm:$0xf]
    %v85 = vld [vmem:[#allocation5 + $0x2c] sm:$0x3]
    %v86 = vld [vmem:[#allocation8] sm:$0x1]
    %v88 = vlaneseq
    %v89 = vshrl.u32 %v88, 7
    %v90 = vsub.s32 0, %v89
    %v91 = vrot.slane %v86, %v90
    %v105 = vunpack.c.l.b16 %v74
    %v106 = vunpack.c.l.b16 %v75
    %v107 = vunpack.c.l.b16 %v76
    %v108 = vunpack.c.l.b16 %v77
    %v109 = vunpack.c.l.b16 %v78
    %v110 = vunpack.c.l.b16 %v79
    %v111 = vunpack.c.l.b16 %v80
    %v112 = vunpack.c.l.b16 %v81
    %v113 = vunpack.c.l.b16 %v82
    %v114 = vunpack.c.l.b16 %v83
    %v115 = vunpack.c.l.b16 %v84
    %v116 = vunpack.c.l.b16 %v85
    %v117 = vpack.c.b16 %v106, %v105
    %v118 = vpack.c.b16 %v108, %v107
    %v119 = vpack.c.b16 %v110, %v109
    %v120 = vpack.c.b16 %v112, %v111
    %v121 = vpack.c.b16 %v114, %v113
    %v122 = vpack.c.b16 %v116, %v115
    %vm128 = vcmask 752640
    %v130 = vsel %vm128, %v73, 0
    %vm132 = vcmask 1045504
    %v134 = vsel %vm132, %v122, 0
    %136 = vmatprep.subr.bf16.mxu0 0
    %137 = vmatpush1.bf16.msra.mxu0 0
    %138 = vmatprep.subr.bf16.mxu0 0
    %139 = vmatpush1.bf16.msra.mxu0 0
    %140 = vmatprep.subr.bf16.mxu0 0
    %141 = vmatpush1.bf16.msra.mxu0 %v134
    %142 = vmatprep.subr.bf16.mxu0 0
    %143 = vmatpush1.bf16.msra.mxu0 %v121
    %144 = vmatprep.subr.bf16.mxu0 0
    %145 = vmatpush1.bf16.msra.mxu0 %v120
    %146 = vmatprep.subr.bf16.mxu0 0
    %147 = vmatpush1.bf16.msra.mxu0 %v119
    %148 = vmatprep.subr.bf16.mxu0 0
    %149 = vmatpush1.bf16.msra.mxu0 %v118
    %150 = vmatprep.subr.bf16.mxu0 0
    %151 = vmatpush1.bf16.msra.mxu0 %v117
    %152 = vmatprep.subr.bf16.mxu0 0
    %153 = vmatpush2.bf16.msra.mxu0 0
    %154 = vmatprep.subr.bf16.mxu0 0
    %155 = vmatpush2.bf16.msra.mxu0 0
    %156 = vmatprep.subr.bf16.mxu0 0
    %157 = vmatpush2.bf16.msra.mxu0 0
    %158 = vmatprep.subr.bf16.mxu0 0
    %159 = vmatpush2.bf16.msra.mxu0 0
    %160 = vmatprep.subr.bf16.mxu0 0
    %161 = vmatpush2.bf16.msra.mxu0 0
    %162 = vmatprep.subr.bf16.mxu0 0
    %163 = vmatpush2.bf16.msra.mxu0 0
    %164 = vmatprep.subr.bf16.mxu0 0
    %165 = vmatpush2.bf16.msra.mxu0 0
    %166 = vmatprep.subr.bf16.mxu0 0
    %167 = vmatpush2.bf16.msra.mxu0 0
    %168 = vmatprep.mubr.bf16.mxu0 0
    %169 = vmatmul.mubr.bf16.gmra.mxu0 %v130
    %v170 = vpop.f32.mrf.mxu0
    %v171 = vadd.f32 %v91, %v170
    %v172 = vpop.f32.mrf.mxu0
    %v173 = vpop.f32.mrf.mxu0
    %v174 = vpop.f32.mrf.mxu0
    %175 = vdwg.mxu0
    %v176 = vtanh.pop %v171
    %v177 = vpack.c.bf16 %v176, %v176
    %v178 = vld [vmem:[#allocation7] sm:$0xf]
    %v179 = vld [vmem:[#allocation7 + $0x4] sm:$0xf]
    %v180 = vld [vmem:[#allocation7 + $0x8] sm:$0xf]
    %v181 = vld [vmem:[#allocation7 + $0xc] sm:$0xf]
    %v182 = vld [vmem:[#allocation7 + $0x10] sm:$0xf]
    %v183 = vld [vmem:[#allocation7 + $0x14] sm:$0xf]
    %v184 = vld [vmem:[#allocation7 + $0x18] sm:$0xf]
    %v185 = vld [vmem:[#allocation7 + $0x1c] sm:$0xf]
    %v186 = vld [vmem:[#allocation7 + $0x20] sm:$0xf]
    %v187 = vld [vmem:[#allocation7 + $0x24] sm:$0xf]
    %v188 = vld [vmem:[#allocation7 + $0x28] sm:$0xf]
    %v189 = vld [vmem:[#allocation7 + $0x2c] sm:$0xf]
    %v190 = vld [vmem:[#allocation7 + $0x30] sm:$0xf]
    %v191 = vld [vmem:[#allocation7 + $0x34] sm:$0xf]
    %v192 = vld [vmem:[#allocation7 + $0x38] sm:$0xf]
    %v193 = vld [vmem:[#allocation7 + $0x3c] sm:$0xf]
    %s194 = scalar_lea.vmem [#allocation8], 1
    %v195 = vld [vmem:[%s194] sm:$0x1]
    %v197 = vlaneseq
    %v198 = vshrl.u32 %v197, 7
    %v199 = vsub.s32 0, %v198
    %v200 = vrot.slane %v195, %v199
    %v218 = vunpack.c.l.b16 %v178
    %v219 = vunpack.c.l.b16 %v179
    %v220 = vunpack.c.l.b16 %v180
    %v221 = vunpack.c.l.b16 %v181
    %v222 = vunpack.c.l.b16 %v182
    %v223 = vunpack.c.l.b16 %v183
    %v224 = vunpack.c.l.b16 %v184
    %v225 = vunpack.c.l.b16 %v185
    %v226 = vunpack.c.l.b16 %v186
    %v227 = vunpack.c.l.b16 %v187
    %v228 = vunpack.c.l.b16 %v188
    %v229 = vunpack.c.l.b16 %v189
    %v230 = vunpack.c.l.b16 %v190
    %v231 = vunpack.c.l.b16 %v191
    %v232 = vunpack.c.l.b16 %v192
    %v233 = vunpack.c.l.b16 %v193
    %v234 = vpack.c.b16 %v219, %v218
    %v235 = vpack.c.b16 %v221, %v220
    %v236 = vpack.c.b16 %v223, %v222
    %v237 = vpack.c.b16 %v225, %v224
    %v238 = vpack.c.b16 %v227, %v226
    %v239 = vpack.c.b16 %v229, %v228
    %v240 = vpack.c.b16 %v231, %v230
    %v241 = vpack.c.b16 %v233, %v232
    %250 = vmatprep.subr.bf16.mxu0 0
    %251 = vmatpush1.bf16.msra.mxu0 %v241
    %252 = vmatprep.subr.bf16.mxu0 0
    %253 = vmatpush1.bf16.msra.mxu0 %v240
    %254 = vmatprep.subr.bf16.mxu0 0
    %255 = vmatpush1.bf16.msra.mxu0 %v239
    %256 = vmatprep.subr.bf16.mxu0 0
    %257 = vmatpush1.bf16.msra.mxu0 %v238
    %258 = vmatprep.subr.bf16.mxu0 0
    %259 = vmatpush1.bf16.msra.mxu0 %v237
    %260 = vmatprep.subr.bf16.mxu0 0
    %261 = vmatpush1.bf16.msra.mxu0 %v236
    %262 = vmatprep.subr.bf16.mxu0 0
    %263 = vmatpush1.bf16.msra.mxu0 %v235
    %264 = vmatprep.subr.bf16.mxu0 0
    %265 = vmatpush1.bf16.msra.mxu0 %v234
    %266 = vmatprep.subr.bf16.mxu0 0
    %267 = vmatpush2.bf16.msra.mxu0 0
    %268 = vmatprep.subr.bf16.mxu0 0
    %269 = vmatpush2.bf16.msra.mxu0 0
    %270 = vmatprep.subr.bf16.mxu0 0
    %271 = vmatpush2.bf16.msra.mxu0 0
    %272 = vmatprep.subr.bf16.mxu0 0
    %273 = vmatpush2.bf16.msra.mxu0 0
    %274 = vmatprep.subr.bf16.mxu0 0
    %275 = vmatpush2.bf16.msra.mxu0 0
    %276 = vmatprep.subr.bf16.mxu0 0
    %277 = vmatpush2.bf16.msra.mxu0 0
    %278 = vmatprep.subr.bf16.mxu0 0
    %279 = vmatpush2.bf16.msra.mxu0 0
    %280 = vmatprep.subr.bf16.mxu0 0
    %281 = vmatpush2.bf16.msra.mxu0 0
    %282 = vmatprep.mubr.bf16.mxu0 0
    %283 = vmatmul.mubr.bf16.gmra.mxu0 %v177
    %v284 = vpop.f32.mrf.mxu0
    %v285 = vadd.f32 %v200, %v284
    %v286 = vpop.f32.mrf.mxu0
    %v287 = vpop.f32.mrf.mxu0
    %v288 = vpop.f32.mrf.mxu0
    %289 = vdwg.mxu0
    %v290 = vtanh.pop %v285
    %v291 = vpack.c.bf16 %v290, %v290
    %s292 = scalar_lea.vmem [#allocation7], 64
    %v293 = vld [vmem:[%s292] sm:$0xf]
    %v294 = vld [vmem:[%s292 + $0x4] sm:$0xf]
    %v295 = vld [vmem:[%s292 + $0x8] sm:$0xf]
    %v296 = vld [vmem:[%s292 + $0xc] sm:$0xf]
    %v297 = vld [vmem:[%s292 + $0x10] sm:$0xf]
    %v298 = vld [vmem:[%s292 + $0x14] sm:$0xf]
    %v299 = vld [vmem:[%s292 + $0x18] sm:$0xf]
    %v300 = vld [vmem:[%s292 + $0x1c] sm:$0xf]
    %v301 = vld [vmem:[%s292 + $0x20] sm:$0xf]
    %v302 = vld [vmem:[%s292 + $0x24] sm:$0xf]
    %v303 = vld [vmem:[%s292 + $0x28] sm:$0xf]
    %v304 = vld [vmem:[%s292 + $0x2c] sm:$0xf]
    %v305 = vld [vmem:[%s292 + $0x30] sm:$0xf]
    %v306 = vld [vmem:[%s292 + $0x34] sm:$0xf]
    %v307 = vld [vmem:[%s292 + $0x38] sm:$0xf]
    %v308 = vld [vmem:[%s292 + $0x3c] sm:$0xf]
    %s309 = scalar_lea.vmem [#allocation8], 2
    %v310 = vld [vmem:[%s309] sm:$0x1]
    %v312 = vlaneseq
    %v313 = vshrl.u32 %v312, 7
    %v314 = vsub.s32 0, %v313
    %v315 = vrot.slane %v310, %v314
    %v333 = vunpack.c.l.b16 %v293
    %v334 = vunpack.c.l.b16 %v294
    %v335 = vunpack.c.l.b16 %v295
    %v336 = vunpack.c.l.b16 %v296
    %v337 = vunpack.c.l.b16 %v297
    %v338 = vunpack.c.l.b16 %v298
    %v339 = vunpack.c.l.b16 %v299
    %v340 = vunpack.c.l.b16 %v300
    %v341 = vunpack.c.l.b16 %v301
    %v342 = vunpack.c.l.b16 %v302
    %v343 = vunpack.c.l.b16 %v303
    %v344 = vunpack.c.l.b16 %v304
    %v345 = vunpack.c.l.b16 %v305
    %v346 = vunpack.c.l.b16 %v306
    %v347 = vunpack.c.l.b16 %v307
    %v348 = vunpack.c.l.b16 %v308
    %v349 = vpack.c.b16 %v334, %v333
    %v350 = vpack.c.b16 %v336, %v335
    %v351 = vpack.c.b16 %v338, %v337
    %v352 = vpack.c.b16 %v340, %v339
    %v353 = vpack.c.b16 %v342, %v341
    %v354 = vpack.c.b16 %v344, %v343
    %v355 = vpack.c.b16 %v346, %v345
    %v356 = vpack.c.b16 %v348, %v347
    %365 = vmatprep.subr.bf16.mxu0 0
    %366 = vmatpush1.bf16.msra.mxu0 %v356
    %367 = vmatprep.subr.bf16.mxu0 0
    %368 = vmatpush1.bf16.msra.mxu0 %v355
    %369 = vmatprep.subr.bf16.mxu0 0
    %370 = vmatpush1.bf16.msra.mxu0 %v354
    %371 = vmatprep.subr.bf16.mxu0 0
    %372 = vmatpush1.bf16.msra.mxu0 %v353
    %373 = vmatprep.subr.bf16.mxu0 0
    %374 = vmatpush1.bf16.msra.mxu0 %v352
    %375 = vmatprep.subr.bf16.mxu0 0
    %376 = vmatpush1.bf16.msra.mxu0 %v351
    %377 = vmatprep.subr.bf16.mxu0 0
    %378 = vmatpush1.bf16.msra.mxu0 %v350
    %379 = vmatprep.subr.bf16.mxu0 0
    %380 = vmatpush1.bf16.msra.mxu0 %v349
    %381 = vmatprep.subr.bf16.mxu0 0
    %382 = vmatpush2.bf16.msra.mxu0 0
    %383 = vmatprep.subr.bf16.mxu0 0
    %384 = vmatpush2.bf16.msra.mxu0 0
    %385 = vmatprep.subr.bf16.mxu0 0
    %386 = vmatpush2.bf16.msra.mxu0 0
    %387 = vmatprep.subr.bf16.mxu0 0
    %388 = vmatpush2.bf16.msra.mxu0 0
    %389 = vmatprep.subr.bf16.mxu0 0
    %390 = vmatpush2.bf16.msra.mxu0 0
    %391 = vmatprep.subr.bf16.mxu0 0
    %392 = vmatpush2.bf16.msra.mxu0 0
    %393 = vmatprep.subr.bf16.mxu0 0
    %394 = vmatpush2.bf16.msra.mxu0 0
    %395 = vmatprep.subr.bf16.mxu0 0
    %396 = vmatpush2.bf16.msra.mxu0 0
    %397 = vmatprep.mubr.bf16.mxu0 0
    %398 = vmatmul.mubr.bf16.gmra.mxu0 %v291
    %v399 = vpop.f32.mrf.mxu0
    %v400 = vadd.f32 %v315, %v399
    %v401 = vpop.f32.mrf.mxu0
    %v402 = vpop.f32.mrf.mxu0
    %v403 = vpop.f32.mrf.mxu0
    %404 = vdwg.mxu0
    %v405 = vtanh.pop %v400
    %v406 = vpack.c.bf16 %v405, %v405
    %s407 = scalar_lea.vmem [#allocation7], 128
    %v408 = vld [vmem:[%s407] sm:$0xf]
    %v409 = vld [vmem:[%s407 + $0x4] sm:$0xf]
    %v410 = vld [vmem:[%s407 + $0x8] sm:$0xf]
    %v411 = vld [vmem:[%s407 + $0xc] sm:$0xf]
    %v412 = vld [vmem:[%s407 + $0x10] sm:$0xf]
    %v413 = vld [vmem:[%s407 + $0x14] sm:$0xf]
    %v414 = vld [vmem:[%s407 + $0x18] sm:$0xf]
    %v415 = vld [vmem:[%s407 + $0x1c] sm:$0xf]
    %v416 = vld [vmem:[%s407 + $0x20] sm:$0xf]
    %v417 = vld [vmem:[%s407 + $0x24] sm:$0xf]
    %v418 = vld [vmem:[%s407 + $0x28] sm:$0xf]
    %v419 = vld [vmem:[%s407 + $0x2c] sm:$0xf]
    %v420 = vld [vmem:[%s407 + $0x30] sm:$0xf]
    %v421 = vld [vmem:[%s407 + $0x34] sm:$0xf]
    %v422 = vld [vmem:[%s407 + $0x38] sm:$0xf]
    %v423 = vld [vmem:[%s407 + $0x3c] sm:$0xf]
    %s424 = scalar_lea.vmem [#allocation8], 3
    %v425 = vld [vmem:[%s424] sm:$0x1]
    %v427 = vlaneseq
    %v428 = vshrl.u32 %v427, 7
    %v429 = vsub.s32 0, %v428
    %v430 = vrot.slane %v425, %v429
    %v448 = vunpack.c.l.b16 %v408
    %v449 = vunpack.c.l.b16 %v409
    %v450 = vunpack.c.l.b16 %v410
    %v451 = vunpack.c.l.b16 %v411
    %v452 = vunpack.c.l.b16 %v412
    %v453 = vunpack.c.l.b16 %v413
    %v454 = vunpack.c.l.b16 %v414
    %v455 = vunpack.c.l.b16 %v415
    %v456 = vunpack.c.l.b16 %v416
    %v457 = vunpack.c.l.b16 %v417
    %v458 = vunpack.c.l.b16 %v418
    %v459 = vunpack.c.l.b16 %v419
    %v460 = vunpack.c.l.b16 %v420
    %v461 = vunpack.c.l.b16 %v421
    %v462 = vunpack.c.l.b16 %v422
    %v463 = vunpack.c.l.b16 %v423
    %v464 = vpack.c.b16 %v449, %v448
    %v465 = vpack.c.b16 %v451, %v450
    %v466 = vpack.c.b16 %v453, %v452
    %v467 = vpack.c.b16 %v455, %v454
    %v468 = vpack.c.b16 %v457, %v456
    %v469 = vpack.c.b16 %v459, %v458
    %v470 = vpack.c.b16 %v461, %v460
    %v471 = vpack.c.b16 %v463, %v462
    %480 = vmatprep.subr.bf16.mxu0 0
    %481 = vmatpush1.bf16.msra.mxu0 %v471
    %482 = vmatprep.subr.bf16.mxu0 0
    %483 = vmatpush1.bf16.msra.mxu0 %v470
    %484 = vmatprep.subr.bf16.mxu0 0
    %485 = vmatpush1.bf16.msra.mxu0 %v469
    %486 = vmatprep.subr.bf16.mxu0 0
    %487 = vmatpush1.bf16.msra.mxu0 %v468
    %488 = vmatprep.subr.bf16.mxu0 0
    %489 = vmatpush1.bf16.msra.mxu0 %v467
    %490 = vmatprep.subr.bf16.mxu0 0
    %491 = vmatpush1.bf16.msra.mxu0 %v466
    %492 = vmatprep.subr.bf16.mxu0 0
    %493 = vmatpush1.bf16.msra.mxu0 %v465
    %494 = vmatprep.subr.bf16.mxu0 0
    %495 = vmatpush1.bf16.msra.mxu0 %v464
    %496 = vmatprep.subr.bf16.mxu0 0
    %497 = vmatpush2.bf16.msra.mxu0 0
    %498 = vmatprep.subr.bf16.mxu0 0
    %499 = vmatpush2.bf16.msra.mxu0 0
    %500 = vmatprep.subr.bf16.mxu0 0
    %501 = vmatpush2.bf16.msra.mxu0 0
    %502 = vmatprep.subr.bf16.mxu0 0
    %503 = vmatpush2.bf16.msra.mxu0 0
    %504 = vmatprep.subr.bf16.mxu0 0
    %505 = vmatpush2.bf16.msra.mxu0 0
    %506 = vmatprep.subr.bf16.mxu0 0
    %507 = vmatpush2.bf16.msra.mxu0 0
    %508 = vmatprep.subr.bf16.mxu0 0
    %509 = vmatpush2.bf16.msra.mxu0 0
    %510 = vmatprep.subr.bf16.mxu0 0
    %511 = vmatpush2.bf16.msra.mxu0 0
    %512 = vmatprep.mubr.bf16.mxu0 0
    %513 = vmatmul.mubr.bf16.gmra.mxu0 %v406
    %v514 = vpop.f32.mrf.mxu0
    %v515 = vadd.f32 %v430, %v514
    %v516 = vpop.f32.mrf.mxu0
    %v517 = vpop.f32.mrf.mxu0
    %v518 = vpop.f32.mrf.mxu0
    %519 = vdwg.mxu0
    %v520 = vtanh.pop %v515
    %v521 = vpack.c.bf16 %v520, %v520
    %s522 = scalar_lea.vmem [#allocation7], 192
    %v523 = vld [vmem:[%s522] sm:$0xf]
    %v524 = vld [vmem:[%s522 + $0x4] sm:$0xf]
    %v525 = vld [vmem:[%s522 + $0x8] sm:$0xf]
    %v526 = vld [vmem:[%s522 + $0xc] sm:$0xf]
    %v527 = vld [vmem:[%s522 + $0x10] sm:$0xf]
    %v528 = vld [vmem:[%s522 + $0x14] sm:$0xf]
    %v529 = vld [vmem:[%s522 + $0x18] sm:$0xf]
    %v530 = vld [vmem:[%s522 + $0x1c] sm:$0xf]
    %v531 = vld [vmem:[%s522 + $0x20] sm:$0xf]
    %v532 = vld [vmem:[%s522 + $0x24] sm:$0xf]
    %v533 = vld [vmem:[%s522 + $0x28] sm:$0xf]
    %v534 = vld [vmem:[%s522 + $0x2c] sm:$0xf]
    %v535 = vld [vmem:[%s522 + $0x30] sm:$0xf]
    %v536 = vld [vmem:[%s522 + $0x34] sm:$0xf]
    %v537 = vld [vmem:[%s522 + $0x38] sm:$0xf]
    %v538 = vld [vmem:[%s522 + $0x3c] sm:$0xf]
    %s539 = scalar_lea.vmem [#allocation8], 4
    %v540 = vld [vmem:[%s539] sm:$0x1]
    %v542 = vlaneseq
    %v543 = vshrl.u32 %v542, 7
    %v544 = vsub.s32 0, %v543
    %v545 = vrot.slane %v540, %v544
    %v563 = vunpack.c.l.b16 %v523
    %v564 = vunpack.c.l.b16 %v524
    %v565 = vunpack.c.l.b16 %v525
    %v566 = vunpack.c.l.b16 %v526
    %v567 = vunpack.c.l.b16 %v527
    %v568 = vunpack.c.l.b16 %v528
    %v569 = vunpack.c.l.b16 %v529
    %v570 = vunpack.c.l.b16 %v530
    %v571 = vunpack.c.l.b16 %v531
    %v572 = vunpack.c.l.b16 %v532
    %v573 = vunpack.c.l.b16 %v533
    %v574 = vunpack.c.l.b16 %v534
    %v575 = vunpack.c.l.b16 %v535
    %v576 = vunpack.c.l.b16 %v536
    %v577 = vunpack.c.l.b16 %v537
    %v578 = vunpack.c.l.b16 %v538
    %v579 = vpack.c.b16 %v564, %v563
    %v580 = vpack.c.b16 %v566, %v565
    %v581 = vpack.c.b16 %v568, %v567
    %v582 = vpack.c.b16 %v570, %v569
    %v583 = vpack.c.b16 %v572, %v571
    %v584 = vpack.c.b16 %v574, %v573
    %v585 = vpack.c.b16 %v576, %v575
    %v586 = vpack.c.b16 %v578, %v577
    %595 = vmatprep.subr.bf16.mxu0 0
    %596 = vmatpush1.bf16.msra.mxu0 %v586
    %597 = vmatprep.subr.bf16.mxu0 0
    %598 = vmatpush1.bf16.msra.mxu0 %v585
    %599 = vmatprep.subr.bf16.mxu0 0
    %600 = vmatpush1.bf16.msra.mxu0 %v584
    %601 = vmatprep.subr.bf16.mxu0 0
    %602 = vmatpush1.bf16.msra.mxu0 %v583
    %603 = vmatprep.subr.bf16.mxu0 0
    %604 = vmatpush1.bf16.msra.mxu0 %v582
    %605 = vmatprep.subr.bf16.mxu0 0
    %606 = vmatpush1.bf16.msra.mxu0 %v581
    %607 = vmatprep.subr.bf16.mxu0 0
    %608 = vmatpush1.bf16.msra.mxu0 %v580
    %609 = vmatprep.subr.bf16.mxu0 0
    %610 = vmatpush1.bf16.msra.mxu0 %v579
    %611 = vmatprep.subr.bf16.mxu0 0
    %612 = vmatpush2.bf16.msra.mxu0 0
    %613 = vmatprep.subr.bf16.mxu0 0
    %614 = vmatpush2.bf16.msra.mxu0 0
    %615 = vmatprep.subr.bf16.mxu0 0
    %616 = vmatpush2.bf16.msra.mxu0 0
    %617 = vmatprep.subr.bf16.mxu0 0
    %618 = vmatpush2.bf16.msra.mxu0 0
    %619 = vmatprep.subr.bf16.mxu0 0
    %620 = vmatpush2.bf16.msra.mxu0 0
    %621 = vmatprep.subr.bf16.mxu0 0
    %622 = vmatpush2.bf16.msra.mxu0 0
    %623 = vmatprep.subr.bf16.mxu0 0
    %624 = vmatpush2.bf16.msra.mxu0 0
    %625 = vmatprep.subr.bf16.mxu0 0
    %626 = vmatpush2.bf16.msra.mxu0 0
    %627 = vmatprep.mubr.bf16.mxu0 0
    %628 = vmatmul.mubr.bf16.gmra.mxu0 %v521
    %v629 = vpop.f32.mrf.mxu0
    %v630 = vadd.f32 %v545, %v629
    %v631 = vpop.f32.mrf.mxu0
    %v632 = vpop.f32.mrf.mxu0
    %v633 = vpop.f32.mrf.mxu0
    %634 = vdwg.mxu0
    %v635 = vtanh.pop %v630
    %v636 = vpack.c.bf16 %v635, %v635
    %s637 = scalar_lea.vmem [#allocation7], 256
    %v638 = vld [vmem:[%s637] sm:$0xf]
    %v639 = vld [vmem:[%s637 + $0x4] sm:$0xf]
    %v640 = vld [vmem:[%s637 + $0x8] sm:$0xf]
    %v641 = vld [vmem:[%s637 + $0xc] sm:$0xf]
    %v642 = vld [vmem:[%s637 + $0x10] sm:$0xf]
    %v643 = vld [vmem:[%s637 + $0x14] sm:$0xf]
    %v644 = vld [vmem:[%s637 + $0x18] sm:$0xf]
    %v645 = vld [vmem:[%s637 + $0x1c] sm:$0xf]
    %v646 = vld [vmem:[%s637 + $0x20] sm:$0xf]
    %v647 = vld [vmem:[%s637 + $0x24] sm:$0xf]
    %v648 = vld [vmem:[%s637 + $0x28] sm:$0xf]
    %v649 = vld [vmem:[%s637 + $0x2c] sm:$0xf]
    %v650 = vld [vmem:[%s637 + $0x30] sm:$0xf]
    %v651 = vld [vmem:[%s637 + $0x34] sm:$0xf]
    %v652 = vld [vmem:[%s637 + $0x38] sm:$0xf]
    %v653 = vld [vmem:[%s637 + $0x3c] sm:$0xf]
    %s654 = scalar_lea.vmem [#allocation8], 5
    %v655 = vld [vmem:[%s654] sm:$0x1]
    %v657 = vlaneseq
    %v658 = vshrl.u32 %v657, 7
    %v659 = vsub.s32 0, %v658
    %v660 = vrot.slane %v655, %v659
    %v678 = vunpack.c.l.b16 %v638
    %v679 = vunpack.c.l.b16 %v639
    %v680 = vunpack.c.l.b16 %v640
    %v681 = vunpack.c.l.b16 %v641
    %v682 = vunpack.c.l.b16 %v642
    %v683 = vunpack.c.l.b16 %v643
    %v684 = vunpack.c.l.b16 %v644
    %v685 = vunpack.c.l.b16 %v645
    %v686 = vunpack.c.l.b16 %v646
    %v687 = vunpack.c.l.b16 %v647
    %v688 = vunpack.c.l.b16 %v648
    %v689 = vunpack.c.l.b16 %v649
    %v690 = vunpack.c.l.b16 %v650
    %v691 = vunpack.c.l.b16 %v651
    %v692 = vunpack.c.l.b16 %v652
    %v693 = vunpack.c.l.b16 %v653
    %v694 = vpack.c.b16 %v679, %v678
    %v695 = vpack.c.b16 %v681, %v680
    %v696 = vpack.c.b16 %v683, %v682
    %v697 = vpack.c.b16 %v685, %v684
    %v698 = vpack.c.b16 %v687, %v686
    %v699 = vpack.c.b16 %v689, %v688
    %v700 = vpack.c.b16 %v691, %v690
    %v701 = vpack.c.b16 %v693, %v692
    %710 = vmatprep.subr.bf16.mxu0 0
    %711 = vmatpush1.bf16.msra.mxu0 %v701
    %712 = vmatprep.subr.bf16.mxu0 0
    %713 = vmatpush1.bf16.msra.mxu0 %v700
    %714 = vmatprep.subr.bf16.mxu0 0
    %715 = vmatpush1.bf16.msra.mxu0 %v699
    %716 = vmatprep.subr.bf16.mxu0 0
    %717 = vmatpush1.bf16.msra.mxu0 %v698
    %718 = vmatprep.subr.bf16.mxu0 0
    %719 = vmatpush1.bf16.msra.mxu0 %v697
    %720 = vmatprep.subr.bf16.mxu0 0
    %721 = vmatpush1.bf16.msra.mxu0 %v696
    %722 = vmatprep.subr.bf16.mxu0 0
    %723 = vmatpush1.bf16.msra.mxu0 %v695
    %724 = vmatprep.subr.bf16.mxu0 0
    %725 = vmatpush1.bf16.msra.mxu0 %v694
    %726 = vmatprep.subr.bf16.mxu0 0
    %727 = vmatpush2.bf16.msra.mxu0 0
    %728 = vmatprep.subr.bf16.mxu0 0
    %729 = vmatpush2.bf16.msra.mxu0 0
    %730 = vmatprep.subr.bf16.mxu0 0
    %731 = vmatpush2.bf16.msra.mxu0 0
    %732 = vmatprep.subr.bf16.mxu0 0
    %733 = vmatpush2.bf16.msra.mxu0 0
    %734 = vmatprep.subr.bf16.mxu0 0
    %735 = vmatpush2.bf16.msra.mxu0 0
    %736 = vmatprep.subr.bf16.mxu0 0
    %737 = vmatpush2.bf16.msra.mxu0 0
    %738 = vmatprep.subr.bf16.mxu0 0
    %739 = vmatpush2.bf16.msra.mxu0 0
    %740 = vmatprep.subr.bf16.mxu0 0
    %741 = vmatpush2.bf16.msra.mxu0 0
    %742 = vmatprep.mubr.bf16.mxu0 0
    %743 = vmatmul.mubr.bf16.gmra.mxu0 %v636
    %v744 = vpop.f32.mrf.mxu0
    %v745 = vadd.f32 %v660, %v744
    %v746 = vpop.f32.mrf.mxu0
    %v747 = vpop.f32.mrf.mxu0
    %v748 = vpop.f32.mrf.mxu0
    %749 = vdwg.mxu0
    %v750 = vpack.c.bf16 %v745, %v745
    %751 = vst [vmem:[#allocation10] sm:$0xf] %v750
    // Predicated region
    $region34: #{tpu_custom_call.1} parent=1 // pred_check
      _
    $region35: #{tpu_custom_call.1} parent=1 // pred_check_branch
      %753 = sbr.rel (0) target = $region37
    $region36: #{tpu_custom_call.1} parent=1 // pred_region
      %s755 = ssub.s32 64, 64
      %756 = vsyncadd [#allocation4], %s755
      %s758 = sshll.u32 [#allocation10], 4
      %s759 = int_to_ptr.vmem [resolvable:$true] %s758
      %761 = dma.vmem_to_hbm [thread:$0]  %s759, 64, %s4, [#allocation4]
    $region37: #{tpu_custom_call.1} parent=1 // pred_fallthru
      _
    // Predicated region
    $region38: #{tpu_custom_call.1} parent=1 // pred_check
      _
    $region39: #{tpu_custom_call.1} parent=1 // pred_check_branch
      %763 = sbr.rel (0) target = $region41
    $region40: #{tpu_custom_call.1} parent=1 // pred_region
      %764 = dma.done [#allocation4], 64
    $region41: #{tpu_custom_call.1} parent=1 // pred_fallthru
      _
    %765 = vsyncpa [#allocation3], 1
    %766 = vsyncpa [#allocation6], 1
    %767 = vsyncpa [#allocation9], 1
    %768 = vsyncpa [#allocation4], 1

</llo_original>
